<compile_context>
chip_gen: v5e
topology: v5e:2x2
jax: 0.10.0
libtpu: 0.0.40
codegen_flags: <defaults>
</compile_context>

<pallas_src>
import jax
import jax.numpy as jnp
from jax import lax
from jax.experimental import pallas as pl
from jax.experimental.pallas import tpu as pltpu

_LANE = 128
_SUBLANE = 8


def _round_up(n, m):
    return ((n + m - 1) // m) * m


def _make_fused_mlp_kernel(n_hidden):
    """Kernel refs: (x, W0, b0, ..., W_{n-1}, b_{n-1}, Wf_T, out)."""

    def kernel(*refs):
        x_ref, o_ref = refs[0], refs[-1]
        p = refs[1:-1]
        h = x_ref[...].astype(jnp.bfloat16)              # (TILE_B, input_dim)
        for i in range(n_hidden):
            w = p[2 * i][...]                            # (in, out_pad) bf16
            b = p[2 * i + 1][...]                        # (1, out_pad) f32
            y = jnp.dot(h, w, preferred_element_type=jnp.float32)
            h = jnp.maximum(y + b, 0.0).astype(jnp.bfloat16)
        wf_t = p[2 * n_hidden][...]                      # (8, last_pad) bf16
        # Transposed final projection -> (8, TILE_B), lane-dense along batch.
        o_ref[...] = lax.dot_general(
            wf_t, h, (((1,), (1,)), ((), ())),
            preferred_element_type=jnp.float32)

    return kernel


def init_dnn_params(key, input_dim, hidden_units):
    """Matches PyTorch kaiming_uniform_(fan_in, relu): bound = sqrt(6/fan_in),
    bias = 0, final layer has no bias. Hidden weights stored (in, out) with the
    *output* dim zero-padded to a 128 multiple (bf16); the first weight keeps
    its un-padded input dim (the input is padded in-kernel only implicitly via
    the matmul). The final 1-wide projection is stored transposed as
    (8, last_pad) with row 0 holding the real weights."""
    dims = [input_dim] + list(hidden_units)
    dims_pad = [input_dim] + [_round_up(d, _LANE) for d in hidden_units]

    params = {"W": [], "b": [], "input_dim": input_dim}
    for i in range(len(hidden_units)):
        fan_in, fan_out = dims[i], dims[i + 1]
        key, sub = jax.random.split(key)
        bound = float(jnp.sqrt(6.0 / fan_in))
        W = jax.random.uniform(sub, (fan_in, fan_out), jnp.float32, -bound, bound)
        Wp = jnp.zeros((dims_pad[i], dims_pad[i + 1]), jnp.float32)
        Wp = Wp.at[:fan_in, :fan_out].set(W)
        params["W"].append(Wp.astype(jnp.bfloat16))
        params["b"].append(jnp.zeros((1, dims_pad[i + 1]), jnp.float32))

    key, sub = jax.random.split(key)
    bound = float(jnp.sqrt(6.0 / dims[-1]))
    Wf = jax.random.uniform(sub, (dims[-1], 1), jnp.float32, -bound, bound)
    WfT = jnp.zeros((_SUBLANE, dims_pad[-1]), jnp.float32)
    WfT = WfT.at[0, : dims[-1]].set(Wf[:, 0])
    params["W_final_T"] = WfT.astype(jnp.bfloat16)
    return params


def _tpu_vmem_capacity_bytes():
    try:
        return int(pltpu.get_tpu_info().vmem_capacity_bytes)
    except Exception:
        return 64 * 1024 * 1024  # conservative (v7x-sized) fallback


def dnn_layer_forward(x, params, *, tile_b=None):
    """x: (batch, ..., input_dim) f32/bf16 -> (batch, ..., 1) f32."""
    lead_shape = x.shape[:-1]
    input_dim = params["input_dim"]
    Ws, bs, WfT = params["W"], params["b"], params["W_final_T"]
    n_hidden = len(Ws)
    out_rows = WfT.shape[0]  # 8

    x2 = x.reshape((-1, x.shape[-1])).astype(jnp.float32)
    B = x2.shape[0]

    # --- VMEM budget (whole MLP resident, weights single-buffered) ---------
    vmem_cap = _tpu_vmem_capacity_bytes()
    weight_bytes = (
        sum(int(W.size) * 2 for W in Ws)
        + sum(int(b.size) * 4 for b in bs)
        + int(WfT.size) * 2
    )
    widest_pad = max([W.shape[1] for W in Ws] + [WfT.shape[1]])

    def per_tile_bytes(tb):
        x_tile = 2 * tb * input_dim * 4        # double-buffered f32 input tile
        out_tile = 2 * out_rows * tb * 4       # double-buffered f32 output tile
        act = tb * widest_pad * (4 + 2)        # f32 matmul result + bf16 act
        return x_tile + out_tile + act

    if tile_b is None:
        # 128 MiB chips (v5e/v6e) -> big tiles; 64 MiB v7x -> smaller.
        tile_b = 1024 if vmem_cap >= 96 * 1024 * 1024 else 512

    if B <= _LANE:
        tile_b = _round_up(B, _SUBLANE)
    else:
        tile_b = _round_up(min(tile_b, B), _LANE)
        # Keep >=2 grid steps so v7x's two TensorCores both get work.
        half = _round_up(-(-B // 2), _LANE)
        tile_b = max(_LANE, min(tile_b, half))
        # Shrink until the whole-MLP-resident budget fits the VMEM limit.
        while tile_b > _LANE and weight_bytes + per_tile_bytes(tile_b) > int(vmem_cap * 0.75):
            tile_b = max(_LANE, _round_up(tile_b // 2, _LANE))

    B_pad = _round_up(B, tile_b)
    xp = jnp.pad(x2, ((0, B_pad - B), (0, 0)))  # batch-pad only; bf16 cast in-kernel

    needed = weight_bytes + per_tile_bytes(tile_b)
    vmem_limit = min(int(vmem_cap * 0.75), 100 * 1024 * 1024)
    vmem_limit = max(vmem_limit, min(int(vmem_cap * 0.9), needed + (4 << 20)))

    kernel = _make_fused_mlp_kernel(n_hidden)

    # Advisory cost estimate for XLA's scheduler.
    flops = 0
    for W in Ws:
        flops += 2 * B_pad * W.shape[0] * W.shape[1]
    flops += 2 * B_pad * WfT.shape[0] * WfT.shape[1]
    bytes_accessed = int(xp.size) * 4 + weight_bytes + B_pad * out_rows * 4
    cost = pl.CostEstimate(
        flops=int(flops), transcendentals=0, bytes_accessed=int(bytes_accessed)
    )

    def run(single_buffer_weights):
        wmode = {"pipeline_mode": pl.Buffered(1)} if single_buffer_weights else {}
        in_specs = [pl.BlockSpec((tile_b, input_dim), lambda i: (i, 0))]
        inputs = [xp]
        for W, b in zip(Ws, bs):
            in_specs.append(pl.BlockSpec(W.shape, lambda i: (0, 0), **wmode))
            in_specs.append(pl.BlockSpec(b.shape, lambda i: (0, 0), **wmode))
            inputs.extend([W, b])
        in_specs.append(pl.BlockSpec(WfT.shape, lambda i: (0, 0), **wmode))
        inputs.append(WfT)
        out_spec = pl.BlockSpec((out_rows, tile_b), lambda i: (0, i))

        return pl.pallas_call(
            kernel,
            out_shape=jax.ShapeDtypeStruct((out_rows, B_pad), jnp.float32),
            grid_spec=pltpu.PrefetchScalarGridSpec(
                num_scalar_prefetch=0,
                grid=(B_pad // tile_b,),
                in_specs=in_specs,
                out_specs=out_spec,
            ),
            compiler_params=pltpu.CompilerParams(
                dimension_semantics=("parallel",),  # shard batch across v7x's 2 TCs
                vmem_limit_bytes=int(vmem_limit),
            ),
            cost_estimate=cost,
        )(*inputs)

    try:
        out_t = run(True)            # weights single-buffered (preferred)
    except Exception:
        out_t = run(False)           # fallback: default double-buffering

    y = out_t[0, :B]                 # strip sublane + batch padding
    return y.reshape(lead_shape + (1,))


if __name__ == "__main__":
    key = jax.random.PRNGKey(0)
    batch = 8
    input_dim = 32
    hidden_units = (64, 32)

    k_params, k_x = jax.random.split(key)
    params = init_dnn_params(k_params, input_dim, hidden_units)
    x = jax.random.normal(k_x, (batch, input_dim), jnp.float32)

    y = dnn_layer_forward(x, params)
    jax.block_until_ready(y)
    assert y.shape == (batch, 1), y.shape

    # Pure-JAX reference doing the same bf16-in / f32-accumulate math.
    h_ref = x.astype(jnp.bfloat16)
    for W, b in zip(params["W"], params["b"]):
        z = jnp.dot(h_ref, W, preferred_element_type=jnp.float32) + b
        h_ref = jnp.maximum(z, 0.0).astype(jnp.bfloat16)
    y_ref = lax.dot_general(
        params["W_final_T"], h_ref, (((1,), (1,)), ((), ())),
        preferred_element_type=jnp.float32,
    )[0][:, None]

    assert jnp.allclose(y, y_ref, atol=1e-2, rtol=1e-2), (y, y_ref)
    print("KERNEL_OK")
</pallas_src>

<mosaic_0001>
module attributes {stable_mosaic.version = 11 : i64} {
  func.func @kernel(%arg0: i32, %arg1: memref<8x32xf32, #tpu.memory_space<vmem>>, %arg2: memref<32x128xbf16, #tpu.memory_space<vmem>>, %arg3: memref<1x128xf32, #tpu.memory_space<vmem>>, %arg4: memref<128x128xbf16, #tpu.memory_space<vmem>>, %arg5: memref<1x128xf32, #tpu.memory_space<vmem>>, %arg6: memref<8x128xbf16, #tpu.memory_space<vmem>>, %arg7: memref<8x8xf32, #tpu.memory_space<vmem>>) attributes {dimension_semantics = [#tpu.dimension_semantics<parallel>], iteration_bounds = array<i64: 1>, scalar_prefetch = 0 : i64, scratch_operands = 0 : i64, tpu.core_type = #tpu.core_type<tc>, window_params = [{transform_indices = @transform_0, window_bounds = array<i64: 8, 32>}, {pipeline_mode = #tpu.pipeline_mode<synchronous>, transform_indices = @transform_1, window_bounds = array<i64: 32, 128>}, {pipeline_mode = #tpu.pipeline_mode<synchronous>, transform_indices = @transform_2, window_bounds = array<i64: 1, 128>}, {pipeline_mode = #tpu.pipeline_mode<synchronous>, transform_indices = @transform_3, window_bounds = array<i64: 128, 128>}, {pipeline_mode = #tpu.pipeline_mode<synchronous>, transform_indices = @transform_4, window_bounds = array<i64: 1, 128>}, {pipeline_mode = #tpu.pipeline_mode<synchronous>, transform_indices = @transform_5, window_bounds = array<i64: 8, 128>}, {transform_indices = @transform_6, window_bounds = array<i64: 8, 8>}]} {
    %c0 = arith.constant 0 : index
    %c0_0 = arith.constant 0 : index
    %0 = vector.load %arg1[%c0, %c0_0] : memref<8x32xf32, #tpu.memory_space<vmem>>, vector<8x32xf32>
    %1 = arith.truncf %0 : vector<8x32xf32> to vector<8x32xbf16>
    %c0_1 = arith.constant 0 : index
    %c0_2 = arith.constant 0 : index
    %2 = vector.load %arg2[%c0_1, %c0_2] : memref<32x128xbf16, #tpu.memory_space<vmem>>, vector<32x128xbf16>
    %c0_3 = arith.constant 0 : index
    %c0_4 = arith.constant 0 : index
    %3 = vector.load %arg3[%c0_3, %c0_4] : memref<1x128xf32, #tpu.memory_space<vmem>>, vector<1x128xf32>
    %cst = arith.constant dense<0.000000e+00> : vector<8x128xf32>
    %4 = tpu.matmul %1, %2, %cst {dimension_numbers = #tpu.dot_dimension_numbers<[1], [0], [0], [1], [0, 0, 1, 1], [], []>} : vector<8x32xbf16>, vector<32x128xbf16>, vector<8x128xf32> -> vector<8x128xf32>
    %5 = vector.broadcast %3 : vector<1x128xf32> to vector<8x128xf32>
    %6 = arith.addf %4, %5 : vector<8x128xf32>
    %cst_5 = arith.constant 0.000000e+00 : f32
    %7 = vector.broadcast %cst_5 : f32 to vector<8x128xf32>
    %8 = arith.maximumf %6, %7 : vector<8x128xf32>
    %9 = arith.truncf %8 : vector<8x128xf32> to vector<8x128xbf16>
    %c0_6 = arith.constant 0 : index
    %c0_7 = arith.constant 0 : index
    %10 = vector.load %arg4[%c0_6, %c0_7] : memref<128x128xbf16, #tpu.memory_space<vmem>>, vector<128x128xbf16>
    %c0_8 = arith.constant 0 : index
    %c0_9 = arith.constant 0 : index
    %11 = vector.load %arg5[%c0_8, %c0_9] : memref<1x128xf32, #tpu.memory_space<vmem>>, vector<1x128xf32>
    %cst_10 = arith.constant dense<0.000000e+00> : vector<8x128xf32>
    %12 = tpu.matmul %9, %10, %cst_10 {dimension_numbers = #tpu.dot_dimension_numbers<[1], [0], [0], [1], [0, 0, 1, 1], [], []>} : vector<8x128xbf16>, vector<128x128xbf16>, vector<8x128xf32> -> vector<8x128xf32>
    %13 = vector.broadcast %11 : vector<1x128xf32> to vector<8x128xf32>
    %14 = arith.addf %12, %13 : vector<8x128xf32>
    %cst_11 = arith.constant 0.000000e+00 : f32
    %15 = vector.broadcast %cst_11 : f32 to vector<8x128xf32>
    %16 = arith.maximumf %14, %15 : vector<8x128xf32>
    %17 = arith.truncf %16 : vector<8x128xf32> to vector<8x128xbf16>
    %c0_12 = arith.constant 0 : index
    %c0_13 = arith.constant 0 : index
    %18 = vector.load %arg6[%c0_12, %c0_13] : memref<8x128xbf16, #tpu.memory_space<vmem>>, vector<8x128xbf16>
    %cst_14 = arith.constant dense<0.000000e+00> : vector<8x8xf32>
    %19 = tpu.matmul %18, %17, %cst_14 {dimension_numbers = #tpu.dot_dimension_numbers<[1], [1], [0], [0], [0, 0, 1, 0], [], []>} : vector<8x128xbf16>, vector<8x128xbf16>, vector<8x8xf32> -> vector<8x8xf32>
    %c0_15 = arith.constant 0 : index
    %c0_16 = arith.constant 0 : index
    %20 = vector.load %arg7[%c0_15, %c0_16] : memref<8x8xf32, #tpu.memory_space<vmem>>, vector<8x8xf32>
    tpu.vector_store %arg7[%c0_15, %c0_16], %19 {strides = array<i32>} : memref<8x8xf32, #tpu.memory_space<vmem>>, vector<8x8xf32>,
    return
  }
  func.func @transform_0(%arg0: i32) -> (i32, i32) {
    %c0_i32 = arith.constant 0 : i32
    %c0_i32_0 = arith.constant 0 : i32
    return %arg0, %c0_i32 : i32, i32
  }
  func.func @transform_1(%arg0: i32) -> (i32, i32) {
    %c0_i32 = arith.constant 0 : i32
    %c0_i32_0 = arith.constant 0 : i32
    %c0_i32_1 = arith.constant 0 : i32
    return %c0_i32, %c0_i32_0 : i32, i32
  }
  func.func @transform_2(%arg0: i32) -> (i32, i32) {
    %c0_i32 = arith.constant 0 : i32
    %c0_i32_0 = arith.constant 0 : i32
    %c0_i32_1 = arith.constant 0 : i32
    return %c0_i32, %c0_i32_0 : i32, i32
  }
  func.func @transform_3(%arg0: i32) -> (i32, i32) {
    %c0_i32 = arith.constant 0 : i32
    %c0_i32_0 = arith.constant 0 : i32
    %c0_i32_1 = arith.constant 0 : i32
    return %c0_i32, %c0_i32_0 : i32, i32
  }
  func.func @transform_4(%arg0: i32) -> (i32, i32) {
    %c0_i32 = arith.constant 0 : i32
    %c0_i32_0 = arith.constant 0 : i32
    %c0_i32_1 = arith.constant 0 : i32
    return %c0_i32, %c0_i32_0 : i32, i32
  }
  func.func @transform_5(%arg0: i32) -> (i32, i32) {
    %c0_i32 = arith.constant 0 : i32
    %c0_i32_0 = arith.constant 0 : i32
    %c0_i32_1 = arith.constant 0 : i32
    return %c0_i32, %c0_i32_0 : i32, i32
  }
  func.func @transform_6(%arg0: i32) -> (i32, i32) {
    %c0_i32 = arith.constant 0 : i32
    %c0_i32_0 = arith.constant 0 : i32
    return %c0_i32, %arg0 : i32, i32
  }
}

module attributes {stable_mosaic.version = 11 : i64} {
  func.func @kernel(%arg0: i32, %arg1: memref<8x32xf32, #tpu.memory_space<vmem>>, %arg2: memref<32x128xbf16, #tpu.memory_space<vmem>>, %arg3: memref<1x128xf32, #tpu.memory_space<vmem>>, %arg4: memref<128x128xbf16, #tpu.memory_space<vmem>>, %arg5: memref<1x128xf32, #tpu.memory_space<vmem>>, %arg6: memref<8x128xbf16, #tpu.memory_space<vmem>>, %arg7: memref<8x8xf32, #tpu.memory_space<vmem>>) attributes {dimension_semantics = [#tpu.dimension_semantics<parallel>], iteration_bounds = array<i64: 1>, scalar_prefetch = 0 : i64, scratch_operands = 0 : i64, tpu.core_type = #tpu.core_type<tc>, window_params = [{transform_indices = @transform_0, window_bounds = array<i64: 8, 32>}, {pipeline_mode = #tpu.pipeline_mode<synchronous>, transform_indices = @transform_1, window_bounds = array<i64: 32, 128>}, {pipeline_mode = #tpu.pipeline_mode<synchronous>, transform_indices = @transform_2, window_bounds = array<i64: 1, 128>}, {pipeline_mode = #tpu.pipeline_mode<synchronous>, transform_indices = @transform_3, window_bounds = array<i64: 128, 128>}, {pipeline_mode = #tpu.pipeline_mode<synchronous>, transform_indices = @transform_4, window_bounds = array<i64: 1, 128>}, {pipeline_mode = #tpu.pipeline_mode<synchronous>, transform_indices = @transform_5, window_bounds = array<i64: 8, 128>}, {transform_indices = @transform_6, window_bounds = array<i64: 8, 8>}]} {
    %c0 = arith.constant 0 : index
    %c0_0 = arith.constant 0 : index
    %0 = vector.load %arg1[%c0, %c0_0] : memref<8x32xf32, #tpu.memory_space<vmem>>, vector<8x32xf32>
    %1 = arith.truncf %0 : vector<8x32xf32> to vector<8x32xbf16>
    %c0_1 = arith.constant 0 : index
    %c0_2 = arith.constant 0 : index
    %2 = vector.load %arg2[%c0_1, %c0_2] : memref<32x128xbf16, #tpu.memory_space<vmem>>, vector<32x128xbf16>
    %c0_3 = arith.constant 0 : index
    %c0_4 = arith.constant 0 : index
    %3 = vector.load %arg3[%c0_3, %c0_4] : memref<1x128xf32, #tpu.memory_space<vmem>>, vector<1x128xf32>
    %cst = arith.constant dense<0.000000e+00> : vector<8x128xf32>
    %4 = tpu.matmul %1, %2, %cst {dimension_numbers = #tpu.dot_dimension_numbers<[1], [0], [0], [1], [0, 0, 1, 1], [], []>} : vector<8x32xbf16>, vector<32x128xbf16>, vector<8x128xf32> -> vector<8x128xf32>
    %5 = vector.broadcast %3 : vector<1x128xf32> to vector<8x128xf32>
    %6 = arith.addf %4, %5 : vector<8x128xf32>
    %cst_5 = arith.constant 0.000000e+00 : f32
    %7 = vector.broadcast %cst_5 : f32 to vector<8x128xf32>
    %8 = arith.maximumf %6, %7 : vector<8x128xf32>
    %9 = arith.truncf %8 : vector<8x128xf32> to vector<8x128xbf16>
    %c0_6 = arith.constant 0 : index
    %c0_7 = arith.constant 0 : index
    %10 = vector.load %arg4[%c0_6, %c0_7] : memref<128x128xbf16, #tpu.memory_space<vmem>>, vector<128x128xbf16>
    %c0_8 = arith.constant 0 : index
    %c0_9 = arith.constant 0 : index
    %11 = vector.load %arg5[%c0_8, %c0_9] : memref<1x128xf32, #tpu.memory_space<vmem>>, vector<1x128xf32>
    %cst_10 = arith.constant dense<0.000000e+00> : vector<8x128xf32>
    %12 = tpu.matmul %9, %10, %cst_10 {dimension_numbers = #tpu.dot_dimension_numbers<[1], [0], [0], [1], [0, 0, 1, 1], [], []>} : vector<8x128xbf16>, vector<128x128xbf16>, vector<8x128xf32> -> vector<8x128xf32>
    %13 = vector.broadcast %11 : vector<1x128xf32> to vector<8x128xf32>
    %14 = arith.addf %12, %13 : vector<8x128xf32>
    %cst_11 = arith.constant 0.000000e+00 : f32
    %15 = vector.broadcast %cst_11 : f32 to vector<8x128xf32>
    %16 = arith.maximumf %14, %15 : vector<8x128xf32>
    %17 = arith.truncf %16 : vector<8x128xf32> to vector<8x128xbf16>
    %c0_12 = arith.constant 0 : index
    %c0_13 = arith.constant 0 : index
    %18 = vector.load %arg6[%c0_12, %c0_13] : memref<8x128xbf16, #tpu.memory_space<vmem>>, vector<8x128xbf16>
    %cst_14 = arith.constant dense<0.000000e+00> : vector<8x8xf32>
    %19 = tpu.matmul %18, %17, %cst_14 {dimension_numbers = #tpu.dot_dimension_numbers<[1], [1], [0], [0], [0, 0, 1, 0], [], []>} : vector<8x128xbf16>, vector<8x128xbf16>, vector<8x8xf32> -> vector<8x8xf32>
    %c0_15 = arith.constant 0 : index
    %c0_16 = arith.constant 0 : index
    %20 = vector.load %arg7[%c0_15, %c0_16] : memref<8x8xf32, #tpu.memory_space<vmem>>, vector<8x8xf32>
    tpu.vector_store %arg7[%c0_15, %c0_16], %19 {strides = array<i32>} : memref<8x8xf32, #tpu.memory_space<vmem>>, vector<8x8xf32>,
    return
  }
  func.func @transform_0(%arg0: i32) -> (i32, i32) {
    %c0_i32 = arith.constant 0 : i32
    %c0_i32_0 = arith.constant 0 : i32
    return %arg0, %c0_i32 : i32, i32
  }
  func.func @transform_1(%arg0: i32) -> (i32, i32) {
    %c0_i32 = arith.constant 0 : i32
    %c0_i32_0 = arith.constant 0 : i32
    %c0_i32_1 = arith.constant 0 : i32
    return %c0_i32, %c0_i32_0 : i32, i32
  }
  func.func @transform_2(%arg0: i32) -> (i32, i32) {
    %c0_i32 = arith.constant 0 : i32
    %c0_i32_0 = arith.constant 0 : i32
    %c0_i32_1 = arith.constant 0 : i32
    return %c0_i32, %c0_i32_0 : i32, i32
  }
  func.func @transform_3(%arg0: i32) -> (i32, i32) {
    %c0_i32 = arith.constant 0 : i32
    %c0_i32_0 = arith.constant 0 : i32
    %c0_i32_1 = arith.constant 0 : i32
    return %c0_i32, %c0_i32_0 : i32, i32
  }
  func.func @transform_4(%arg0: i32) -> (i32, i32) {
    %c0_i32 = arith.constant 0 : i32
    %c0_i32_0 = arith.constant 0 : i32
    %c0_i32_1 = arith.constant 0 : i32
    return %c0_i32, %c0_i32_0 : i32, i32
  }
  func.func @transform_5(%arg0: i32) -> (i32, i32) {
    %c0_i32 = arith.constant 0 : i32
    %c0_i32_0 = arith.constant 0 : i32
    %c0_i32_1 = arith.constant 0 : i32
    return %c0_i32, %c0_i32_0 : i32, i32
  }
  func.func @transform_6(%arg0: i32) -> (i32, i32) {
    %c0_i32 = arith.constant 0 : i32
    %c0_i32_0 = arith.constant 0 : i32
    return %c0_i32, %arg0 : i32, i32
  }
}

</mosaic_0001>

<llo_original>
// kernel: tpu_custom_call.1
$region0: #{tpu_custom_call.1}
  #allocation0 [shape = 'u32[]', space=smem, size = 0x4, offset = 0x4, fixed_abs, tag = 'smem constant byte address 0x4 - core index']
  #allocation1 [shape = 'u32[72,128]{1,0:T(1,128)}', space=vmem, size = 0x9000, scoped, tag = 'internal scratch']
  %s0 = inlined_call_operand.hbm [shape: f32[8,32], index: 0, kind: input, shape index: {}]
  %s1 = inlined_call_operand.hbm [shape: bf16[32,128], index: 1, kind: input, shape index: {}]
  %s2 = inlined_call_operand.hbm [shape: f32[1,128], index: 2, kind: input, shape index: {}]
  %s3 = inlined_call_operand.hbm [shape: bf16[128,128], index: 3, kind: input, shape index: {}]
  %s4 = inlined_call_operand.hbm [shape: f32[1,128], index: 4, kind: input, shape index: {}]
  %s5 = inlined_call_operand.vmem [shape: bf16[8,128], index: 5, kind: input, shape index: {}]
  %s6 = inlined_call_operand.hbm [shape: f32[8,8], index: 6, kind: output, shape index: {}]
  %s7 = sld [smem:[#allocation0]]
  $region54: #{tpu_custom_call.1} parent=0
    _
  %s9 = ssub.s32 1, %s7
  %s10 = scalar_select 0, %s9, %s7
  $region1: #{tpu_custom_call.1} parent=0
    #allocation2 [shape = 'u8[4096]{0}', space=vmem, size = 0x1000, scoped, tag = 'input window, operand 0, single buffered']
    #allocation3 [shape = 's32[1]{0}', space=sflag, size = 0x4, scoped, tag = 'scoped memory for tpu_custom_call.1']
    #allocation4 [shape = 's32[1]{0}', space=sflag, size = 0x4, scoped, tag = 'scoped memory for tpu_custom_call.1']
    #allocation5 [shape = 'u8[8192]{0}', space=vmem, size = 0x2000, scoped, tag = 'input window, operand 1, single buffered']
    #allocation6 [shape = 's32[1]{0}', space=sflag, size = 0x4, scoped, tag = 'scoped memory for tpu_custom_call.1']
    #allocation7 [shape = 'u8[512]{0}', space=vmem, size = 0x400, scoped, tag = 'input window, operand 2, single buffered']
    #allocation8 [shape = 'u8[32768]{0}', space=vmem, size = 0x8000, scoped, tag = 'input window, operand 3, single buffered']
    #allocation9 [shape = 's32[1]{0}', space=sflag, size = 0x4, scoped, tag = 'scoped memory for tpu_custom_call.1']
    #allocation10 [shape = 'u8[512]{0}', space=vmem, size = 0x400, scoped, tag = 'input window, operand 4, single buffered']
    #allocation11 [shape = 'u8[4096]{0}', space=vmem, size = 0x1000, scoped, tag = 'output window, operand 0, single buffered']
    %11 = vsyncpa [#allocation3], 0
    %12 = vsyncpa [#allocation6], 0
    %13 = vsyncpa [#allocation9], 0
    %14 = vsyncpa [#allocation4], 0
    // Predicated region
    $region2: #{tpu_custom_call.1} parent=1 // pred_check
      _
    $region3: #{tpu_custom_call.1} parent=1 // pred_check_branch
      %16 = sbr.rel (0) target = $region5
    $region4: #{tpu_custom_call.1} parent=1 // pred_region
      %18 = vsyncadd [#allocation3], 0
      %s20 = sshll.u32 %s0, 4
      %s21 = int_to_ptr.hbm [resolvable:$true] %s20
      %s22 = sshll.u32 [#allocation2], 4
      %s23 = int_to_ptr.vmem [resolvable:$true] %s22
      %25 = dma.hbm_to_vmem [thread:$0]  %s21, 128, %s23, [#allocation3]
    $region5: #{tpu_custom_call.1} parent=1 // pred_fallthru
      _
    // Predicated region
    $region6: #{tpu_custom_call.1} parent=1 // pred_check
      _
    $region7: #{tpu_custom_call.1} parent=1 // pred_check_branch
      %27 = sbr.rel (0) target = $region9
    $region8: #{tpu_custom_call.1} parent=1 // pred_region
      %29 = vsyncadd [#allocation6], 0
      %s30 = sshll.u32 %s1, 4
      %s31 = int_to_ptr.hbm [resolvable:$true] %s30
      %s32 = sshll.u32 [#allocation5], 4
      %s33 = int_to_ptr.vmem [resolvable:$true] %s32
      %38 = dma.hbm_to_vmem [thread:$0]  %s31, 256, %s33, [#allocation6], 64, 64, 4
    $region9: #{tpu_custom_call.1} parent=1 // pred_fallthru
      _
    // Predicated region
    $region10: #{tpu_custom_call.1} parent=1 // pred_check
      _
    $region11: #{tpu_custom_call.1} parent=1 // pred_check_branch
      %40 = sbr.rel (0) target = $region13
    $region12: #{tpu_custom_call.1} parent=1 // pred_region
      %42 = vsyncadd [#allocation6], 0
      %s44 = sshll.u32 %s2, 4
      %s45 = int_to_ptr.hbm [resolvable:$true] %s44
      %s46 = sshll.u32 [#allocation7], 4
      %s47 = int_to_ptr.vmem [resolvable:$true] %s46
      %49 = dma.hbm_to_vmem [thread:$0]  %s45, 16, %s47, [#allocation6]
    $region13: #{tpu_custom_call.1} parent=1 // pred_fallthru
      _
    // Predicated region
    $region14: #{tpu_custom_call.1} parent=1 // pred_check
      _
    $region15: #{tpu_custom_call.1} parent=1 // pred_check_branch
      %51 = sbr.rel (0) target = $region17
    $region16: #{tpu_custom_call.1} parent=1 // pred_region
      %53 = vsyncadd [#allocation9], 0
      %s54 = sshll.u32 %s3, 4
      %s55 = int_to_ptr.hbm [resolvable:$true] %s54
      %s56 = sshll.u32 [#allocation8], 4
      %s57 = int_to_ptr.vmem [resolvable:$true] %s56
      %62 = dma.hbm_to_vmem [thread:$0]  %s55, 1024, %s57, [#allocation9], 64, 64, 4
    $region17: #{tpu_custom_call.1} parent=1 // pred_fallthru
      _
    // Predicated region
    $region18: #{tpu_custom_call.1} parent=1 // pred_check
      _
    $region19: #{tpu_custom_call.1} parent=1 // pred_check_branch
      %64 = sbr.rel (0) target = $region21
    $region20: #{tpu_custom_call.1} parent=1 // pred_region
      %66 = vsyncadd [#allocation9], 0
      %s68 = sshll.u32 %s4, 4
      %s69 = int_to_ptr.hbm [resolvable:$true] %s68
      %s70 = sshll.u32 [#allocation10], 4
      %s71 = int_to_ptr.vmem [resolvable:$true] %s70
      %73 = dma.hbm_to_vmem [thread:$0]  %s69, 16, %s71, [#allocation9]
    $region21: #{tpu_custom_call.1} parent=1 // pred_fallthru
      _
    // Predicated region
    $region22: #{tpu_custom_call.1} parent=1 // pred_check
      _
    $region23: #{tpu_custom_call.1} parent=1 // pred_check_branch
      %75 = sbr.rel (0) target = $region25
    $region24: #{tpu_custom_call.1} parent=1 // pred_region
      _
    $region25: #{tpu_custom_call.1} parent=1 // pred_fallthru
      _
    // Predicated region
    $region26: #{tpu_custom_call.1} parent=1 // pred_check
      _
    $region27: #{tpu_custom_call.1} parent=1 // pred_check_branch
      %77 = sbr.rel (0) target = $region29
    $region28: #{tpu_custom_call.1} parent=1 // pred_region
      %79 = dma.done [#allocation3], 128
    $region29: #{tpu_custom_call.1} parent=1 // pred_fallthru
      _
    // Predicated region
    $region30: #{tpu_custom_call.1} parent=1 // pred_check
      _
    $region31: #{tpu_custom_call.1} parent=1 // pred_check_branch
      %81 = sbr.rel (0) target = $region33
    $region32: #{tpu_custom_call.1} parent=1 // pred_region
      %83 = dma.done [#allocation6], 256
    $region33: #{tpu_custom_call.1} parent=1 // pred_fallthru
      _
    // Predicated region
    $region34: #{tpu_custom_call.1} parent=1 // pred_check
      _
    $region35: #{tpu_custom_call.1} parent=1 // pred_check_branch
      %85 = sbr.rel (0) target = $region37
    $region36: #{tpu_custom_call.1} parent=1 // pred_region
      %87 = dma.done [#allocation6], 16
    $region37: #{tpu_custom_call.1} parent=1 // pred_fallthru
      _
    // Predicated region
    $region38: #{tpu_custom_call.1} parent=1 // pred_check
      _
    $region39: #{tpu_custom_call.1} parent=1 // pred_check_branch
      %89 = sbr.rel (0) target = $region41
    $region40: #{tpu_custom_call.1} parent=1 // pred_region
      %91 = dma.done [#allocation9], 1024
    $region41: #{tpu_custom_call.1} parent=1 // pred_fallthru
      _
    // Predicated region
    $region42: #{tpu_custom_call.1} parent=1 // pred_check
      _
    $region43: #{tpu_custom_call.1} parent=1 // pred_check_branch
      %93 = sbr.rel (0) target = $region45
    $region44: #{tpu_custom_call.1} parent=1 // pred_region
      %95 = dma.done [#allocation9], 16
    $region45: #{tpu_custom_call.1} parent=1 // pred_fallthru
      _
    %v97 = vld [vmem:[#allocation2] sm:$0xff]
    %v98 = vpack.c.bf16 %v97, %v97
    %v99 = vld [vmem:[#allocation5] sm:$0xf]
    %v100 = vld [vmem:[#allocation5 + $0x4] sm:$0xf]
    %v101 = vld [vmem:[#allocation5 + $0x8] sm:$0xf]
    %v102 = vld [vmem:[#allocation5 + $0xc] sm:$0xf]
    %v103 = vld [vmem:[#allocation7] sm:$0x1]
    %v105 = vperm.slane %v103, 0
    %v111 = vunpack.c.l.b16 %v99
    %v112 = vunpack.c.l.b16 %v100
    %v113 = vunpack.c.l.b16 %v101
    %v114 = vunpack.c.l.b16 %v102
    %v115 = vpack.c.b16 %v112, %v111
    %v116 = vpack.c.b16 %v114, %v113
    %vm119 = vcmask 261120
    %v121 = vsel %vm119, %v98, 0
    %123 = vmatpush.bf16.msra.mxu0 0
    %124 = vmatpush.bf16.msra.mxu0 0
    %125 = vmatpush.bf16.msra.mxu0 0
    %126 = vmatpush.bf16.msra.mxu0 0
    %127 = vmatpush.bf16.msra.mxu0 0
    %128 = vmatpush.bf16.msra.mxu0 0
    %129 = vmatpush.bf16.msra.mxu0 %v116
    %130 = vmatpush.bf16.msra.mxu0 %v115
    %131 = vmatmul.bf16.gmra.mxu0 %v121
    %v132 = vpop.f32.mrf.mxu0
    %v133 = vadd.f32 %v105, %v132
    %v134 = vpop.f32.mrf.mxu0
    %135 = vdwg.mxu0
    %v136 = vmax.f32 %v133, 0.0
    %v137 = vpack.c.bf16 %v136, %v136
    %v138 = vld [vmem:[#allocation8] sm:$0xf]
    %v139 = vld [vmem:[#allocation8 + $0x4] sm:$0xf]
    %v140 = vld [vmem:[#allocation8 + $0x8] sm:$0xf]
    %v141 = vld [vmem:[#allocation8 + $0xc] sm:$0xf]
    %v142 = vld [vmem:[#allocation8 + $0x10] sm:$0xf]
    %v143 = vld [vmem:[#allocation8 + $0x14] sm:$0xf]
    %v144 = vld [vmem:[#allocation8 + $0x18] sm:$0xf]
    %v145 = vld [vmem:[#allocation8 + $0x1c] sm:$0xf]
    %v146 = vld [vmem:[#allocation8 + $0x20] sm:$0xf]
    %v147 = vld [vmem:[#allocation8 + $0x24] sm:$0xf]
    %v148 = vld [vmem:[#allocation8 + $0x28] sm:$0xf]
    %v149 = vld [vmem:[#allocation8 + $0x2c] sm:$0xf]
    %v150 = vld [vmem:[#allocation8 + $0x30] sm:$0xf]
    %v151 = vld [vmem:[#allocation8 + $0x34] sm:$0xf]
    %v152 = vld [vmem:[#allocation8 + $0x38] sm:$0xf]
    %v153 = vld [vmem:[#allocation8 + $0x3c] sm:$0xf]
    %v154 = vld [vmem:[#allocation10] sm:$0x1]
    %v156 = vperm.slane %v154, 0
    %v174 = vunpack.c.l.b16 %v138
    %v175 = vunpack.c.l.b16 %v139
    %v176 = vunpack.c.l.b16 %v140
    %v177 = vunpack.c.l.b16 %v141
    %v178 = vunpack.c.l.b16 %v142
    %v179 = vunpack.c.l.b16 %v143
    %v180 = vunpack.c.l.b16 %v144
    %v181 = vunpack.c.l.b16 %v145
    %v182 = vunpack.c.l.b16 %v146
    %v183 = vunpack.c.l.b16 %v147
    %v184 = vunpack.c.l.b16 %v148
    %v185 = vunpack.c.l.b16 %v149
    %v186 = vunpack.c.l.b16 %v150
    %v187 = vunpack.c.l.b16 %v151
    %v188 = vunpack.c.l.b16 %v152
    %v189 = vunpack.c.l.b16 %v153
    %v190 = vpack.c.b16 %v175, %v174
    %v191 = vpack.c.b16 %v177, %v176
    %v192 = vpack.c.b16 %v179, %v178
    %v193 = vpack.c.b16 %v181, %v180
    %v194 = vpack.c.b16 %v183, %v182
    %v195 = vpack.c.b16 %v185, %v184
    %v196 = vpack.c.b16 %v187, %v186
    %v197 = vpack.c.b16 %v189, %v188
    %206 = vmatpush.bf16.msra.mxu0 %v197
    %207 = vmatpush.bf16.msra.mxu0 %v196
    %208 = vmatpush.bf16.msra.mxu0 %v195
    %209 = vmatpush.bf16.msra.mxu0 %v194
    %210 = vmatpush.bf16.msra.mxu0 %v193
    %211 = vmatpush.bf16.msra.mxu0 %v192
    %212 = vmatpush.bf16.msra.mxu0 %v191
    %213 = vmatpush.bf16.msra.mxu0 %v190
    %214 = vmatmul.bf16.gmra.mxu0 %v137
    %v215 = vpop.f32.mrf.mxu0
    %v216 = vadd.f32 %v156, %v215
    %v217 = vpop.f32.mrf.mxu0
    %218 = vdwg.mxu0
    %v219 = vmax.f32 %v216, 0.0
    %v220 = vpack.c.bf16 %v219, %v219
    %v221 = vld [vmem:[%s5] sm:$0xf]
    %222 = vmatpush.bf16.xpose.msra.mxu0 0
    %223 = vmatpush.bf16.xpose.msra.mxu0 0
    %224 = vmatpush.bf16.xpose.msra.mxu0 0
    %225 = vmatpush.bf16.xpose.msra.mxu0 0
    %226 = vmatpush.bf16.xpose.msra.mxu0 0
    %227 = vmatpush.bf16.xpose.msra.mxu0 0
    %228 = vmatpush.bf16.xpose.msra.mxu0 0
    %229 = vmatpush.bf16.xpose.msra.mxu0 %v220
    %230 = vmatmul.bf16.gmra.mxu0 %v221
    %v231 = vpop.f32.mrf.mxu0
    %v232 = vadd.f32 0.0, %v231
    %v233 = vpop.f32.mrf.mxu0
    %234 = vdwg.mxu0
    %vm235 = vcmask 64512
    %236 = vst.msk [vmem:[#allocation11] sm:$0xff] %vm235, %v232
    // Predicated region
    $region46: #{tpu_custom_call.1} parent=1 // pred_check
      _
    $region47: #{tpu_custom_call.1} parent=1 // pred_check_branch
      %238 = sbr.rel (0) target = $region49
    $region48: #{tpu_custom_call.1} parent=1 // pred_region
      %240 = vsyncadd [#allocation4], 0
      %s242 = sshll.u32 [#allocation11], 4
      %s243 = int_to_ptr.vmem [resolvable:$true] %s242
      %s244 = sshll.u32 %s6, 4
      %s245 = int_to_ptr.hbm [resolvable:$true] %s244
      %247 = dma.vmem_to_hbm [thread:$0]  %s243, 128, %s245, [#allocation4]
    $region49: #{tpu_custom_call.1} parent=1 // pred_fallthru
      _
    // Predicated region
    $region50: #{tpu_custom_call.1} parent=1 // pred_check
      _
    $region51: #{tpu_custom_call.1} parent=1 // pred_check_branch
      %249 = sbr.rel (0) target = $region53
    $region52: #{tpu_custom_call.1} parent=1 // pred_region
      %251 = dma.done [#allocation4], 128
    $region53: #{tpu_custom_call.1} parent=1 // pred_fallthru
      _
    %252 = vsyncpa [#allocation3], 1
    %253 = vsyncpa [#allocation6], 1
    %254 = vsyncpa [#allocation9], 1
    %255 = vsyncpa [#allocation4], 1

// kernel: tpu_custom_call.1
$region0: #{tpu_custom_call.1}
  #allocation0 [shape = 'u32[]', space=smem, size = 0x4, offset = 0x4, fixed_abs, tag = 'smem constant byte address 0x4 - core index']
  #allocation1 [shape = 'u32[72,128]{1,0:T(1,128)}', space=vmem, size = 0x9000, scoped, tag = 'internal scratch']
  %s0 = inlined_call_operand.hbm [shape: f32[8,32], index: 0, kind: input, shape index: {}]
  %s1 = inlined_call_operand.hbm [shape: bf16[32,128], index: 1, kind: input, shape index: {}]
  %s2 = inlined_call_operand.hbm [shape: f32[1,128], index: 2, kind: input, shape index: {}]
  %s3 = inlined_call_operand.hbm [shape: bf16[128,128], index: 3, kind: input, shape index: {}]
  %s4 = inlined_call_operand.hbm [shape: f32[1,128], index: 4, kind: input, shape index: {}]
  %s5 = inlined_call_operand.vmem [shape: bf16[8,128], index: 5, kind: input, shape index: {}]
  %s6 = inlined_call_operand.hbm [shape: f32[8,8], index: 6, kind: output, shape index: {}]
  %s7 = sld [smem:[#allocation0]]
  $region54: #{tpu_custom_call.1} parent=0
    _
  %s9 = ssub.s32 1, %s7
  %s10 = scalar_select 0, %s9, %s7
  $region1: #{tpu_custom_call.1} parent=0
    #allocation2 [shape = 'u8[4096]{0}', space=vmem, size = 0x1000, scoped, tag = 'input window, operand 0, single buffered']
    #allocation3 [shape = 's32[1]{0}', space=sflag, size = 0x4, scoped, tag = 'scoped memory for tpu_custom_call.1']
    #allocation4 [shape = 's32[1]{0}', space=sflag, size = 0x4, scoped, tag = 'scoped memory for tpu_custom_call.1']
    #allocation5 [shape = 'u8[8192]{0}', space=vmem, size = 0x2000, scoped, tag = 'input window, operand 1, single buffered']
    #allocation6 [shape = 's32[1]{0}', space=sflag, size = 0x4, scoped, tag = 'scoped memory for tpu_custom_call.1']
    #allocation7 [shape = 'u8[512]{0}', space=vmem, size = 0x400, scoped, tag = 'input window, operand 2, single buffered']
    #allocation8 [shape = 'u8[32768]{0}', space=vmem, size = 0x8000, scoped, tag = 'input window, operand 3, single buffered']
    #allocation9 [shape = 's32[1]{0}', space=sflag, size = 0x4, scoped, tag = 'scoped memory for tpu_custom_call.1']
    #allocation10 [shape = 'u8[512]{0}', space=vmem, size = 0x400, scoped, tag = 'input window, operand 4, single buffered']
    #allocation11 [shape = 'u8[4096]{0}', space=vmem, size = 0x1000, scoped, tag = 'output window, operand 0, single buffered']
    %11 = vsyncpa [#allocation3], 0
    %12 = vsyncpa [#allocation6], 0
    %13 = vsyncpa [#allocation9], 0
    %14 = vsyncpa [#allocation4], 0
    // Predicated region
    $region2: #{tpu_custom_call.1} parent=1 // pred_check
      _
    $region3: #{tpu_custom_call.1} parent=1 // pred_check_branch
      %16 = sbr.rel (0) target = $region5
    $region4: #{tpu_custom_call.1} parent=1 // pred_region
      %18 = vsyncadd [#allocation3], 0
      %s20 = sshll.u32 %s0, 4
      %s21 = int_to_ptr.hbm [resolvable:$true] %s20
      %s22 = sshll.u32 [#allocation2], 4
      %s23 = int_to_ptr.vmem [resolvable:$true] %s22
      %25 = dma.hbm_to_vmem [thread:$0]  %s21, 128, %s23, [#allocation3]
    $region5: #{tpu_custom_call.1} parent=1 // pred_fallthru
      _
    // Predicated region
    $region6: #{tpu_custom_call.1} parent=1 // pred_check
      _
    $region7: #{tpu_custom_call.1} parent=1 // pred_check_branch
      %27 = sbr.rel (0) target = $region9
    $region8: #{tpu_custom_call.1} parent=1 // pred_region
      %29 = vsyncadd [#allocation6], 0
      %s30 = sshll.u32 %s1, 4
      %s31 = int_to_ptr.hbm [resolvable:$true] %s30
      %s32 = sshll.u32 [#allocation5], 4
      %s33 = int_to_ptr.vmem [resolvable:$true] %s32
      %38 = dma.hbm_to_vmem [thread:$0]  %s31, 256, %s33, [#allocation6], 64, 64, 4
    $region9: #{tpu_custom_call.1} parent=1 // pred_fallthru
      _
    // Predicated region
    $region10: #{tpu_custom_call.1} parent=1 // pred_check
      _
    $region11: #{tpu_custom_call.1} parent=1 // pred_check_branch
      %40 = sbr.rel (0) target = $region13
    $region12: #{tpu_custom_call.1} parent=1 // pred_region
      %42 = vsyncadd [#allocation6], 0
      %s44 = sshll.u32 %s2, 4
      %s45 = int_to_ptr.hbm [resolvable:$true] %s44
      %s46 = sshll.u32 [#allocation7], 4
      %s47 = int_to_ptr.vmem [resolvable:$true] %s46
      %49 = dma.hbm_to_vmem [thread:$0]  %s45, 16, %s47, [#allocation6]
    $region13: #{tpu_custom_call.1} parent=1 // pred_fallthru
      _
    // Predicated region
    $region14: #{tpu_custom_call.1} parent=1 // pred_check
      _
    $region15: #{tpu_custom_call.1} parent=1 // pred_check_branch
      %51 = sbr.rel (0) target = $region17
    $region16: #{tpu_custom_call.1} parent=1 // pred_region
      %53 = vsyncadd [#allocation9], 0
      %s54 = sshll.u32 %s3, 4
      %s55 = int_to_ptr.hbm [resolvable:$true] %s54
      %s56 = sshll.u32 [#allocation8], 4
      %s57 = int_to_ptr.vmem [resolvable:$true] %s56
      %62 = dma.hbm_to_vmem [thread:$0]  %s55, 1024, %s57, [#allocation9], 64, 64, 4
    $region17: #{tpu_custom_call.1} parent=1 // pred_fallthru
      _
    // Predicated region
    $region18: #{tpu_custom_call.1} parent=1 // pred_check
      _
    $region19: #{tpu_custom_call.1} parent=1 // pred_check_branch
      %64 = sbr.rel (0) target = $region21
    $region20: #{tpu_custom_call.1} parent=1 // pred_region
      %66 = vsyncadd [#allocation9], 0
      %s68 = sshll.u32 %s4, 4
      %s69 = int_to_ptr.hbm [resolvable:$true] %s68
      %s70 = sshll.u32 [#allocation10], 4
      %s71 = int_to_ptr.vmem [resolvable:$true] %s70
      %73 = dma.hbm_to_vmem [thread:$0]  %s69, 16, %s71, [#allocation9]
    $region21: #{tpu_custom_call.1} parent=1 // pred_fallthru
      _
    // Predicated region
    $region22: #{tpu_custom_call.1} parent=1 // pred_check
      _
    $region23: #{tpu_custom_call.1} parent=1 // pred_check_branch
      %75 = sbr.rel (0) target = $region25
    $region24: #{tpu_custom_call.1} parent=1 // pred_region
      _
    $region25: #{tpu_custom_call.1} parent=1 // pred_fallthru
      _
    // Predicated region
    $region26: #{tpu_custom_call.1} parent=1 // pred_check
      _
    $region27: #{tpu_custom_call.1} parent=1 // pred_check_branch
      %77 = sbr.rel (0) target = $region29
    $region28: #{tpu_custom_call.1} parent=1 // pred_region
      %79 = dma.done [#allocation3], 128
    $region29: #{tpu_custom_call.1} parent=1 // pred_fallthru
      _
    // Predicated region
    $region30: #{tpu_custom_call.1} parent=1 // pred_check
      _
    $region31: #{tpu_custom_call.1} parent=1 // pred_check_branch
      %81 = sbr.rel (0) target = $region33
    $region32: #{tpu_custom_call.1} parent=1 // pred_region
      %83 = dma.done [#allocation6], 256
    $region33: #{tpu_custom_call.1} parent=1 // pred_fallthru
      _
    // Predicated region
    $region34: #{tpu_custom_call.1} parent=1 // pred_check
      _
    $region35: #{tpu_custom_call.1} parent=1 // pred_check_branch
      %85 = sbr.rel (0) target = $region37
    $region36: #{tpu_custom_call.1} parent=1 // pred_region
      %87 = dma.done [#allocation6], 16
    $region37: #{tpu_custom_call.1} parent=1 // pred_fallthru
      _
    // Predicated region
    $region38: #{tpu_custom_call.1} parent=1 // pred_check
      _
    $region39: #{tpu_custom_call.1} parent=1 // pred_check_branch
      %89 = sbr.rel (0) target = $region41
    $region40: #{tpu_custom_call.1} parent=1 // pred_region
      %91 = dma.done [#allocation9], 1024
    $region41: #{tpu_custom_call.1} parent=1 // pred_fallthru
      _
    // Predicated region
    $region42: #{tpu_custom_call.1} parent=1 // pred_check
      _
    $region43: #{tpu_custom_call.1} parent=1 // pred_check_branch
      %93 = sbr.rel (0) target = $region45
    $region44: #{tpu_custom_call.1} parent=1 // pred_region
      %95 = dma.done [#allocation9], 16
    $region45: #{tpu_custom_call.1} parent=1 // pred_fallthru
      _
    %v97 = vld [vmem:[#allocation2] sm:$0xff]
    %v98 = vpack.c.bf16 %v97, %v97
    %v99 = vld [vmem:[#allocation5] sm:$0xf]
    %v100 = vld [vmem:[#allocation5 + $0x4] sm:$0xf]
    %v101 = vld [vmem:[#allocation5 + $0x8] sm:$0xf]
    %v102 = vld [vmem:[#allocation5 + $0xc] sm:$0xf]
    %v103 = vld [vmem:[#allocation7] sm:$0x1]
    %v105 = vperm.slane %v103, 0
    %v111 = vunpack.c.l.b16 %v99
    %v112 = vunpack.c.l.b16 %v100
    %v113 = vunpack.c.l.b16 %v101
    %v114 = vunpack.c.l.b16 %v102
    %v115 = vpack.c.b16 %v112, %v111
    %v116 = vpack.c.b16 %v114, %v113
    %vm119 = vcmask 261120
    %v121 = vsel %vm119, %v98, 0
    %123 = vmatpush.bf16.msra.mxu0 0
    %124 = vmatpush.bf16.msra.mxu0 0
    %125 = vmatpush.bf16.msra.mxu0 0
    %126 = vmatpush.bf16.msra.mxu0 0
    %127 = vmatpush.bf16.msra.mxu0 0
    %128 = vmatpush.bf16.msra.mxu0 0
    %129 = vmatpush.bf16.msra.mxu0 %v116
    %130 = vmatpush.bf16.msra.mxu0 %v115
    %131 = vmatmul.bf16.gmra.mxu0 %v121
    %v132 = vpop.f32.mrf.mxu0
    %v133 = vadd.f32 %v105, %v132
    %v134 = vpop.f32.mrf.mxu0
    %135 = vdwg.mxu0
    %v136 = vmax.f32 %v133, 0.0
    %v137 = vpack.c.bf16 %v136, %v136
    %v138 = vld [vmem:[#allocation8] sm:$0xf]
    %v139 = vld [vmem:[#allocation8 + $0x4] sm:$0xf]
    %v140 = vld [vmem:[#allocation8 + $0x8] sm:$0xf]
    %v141 = vld [vmem:[#allocation8 + $0xc] sm:$0xf]
    %v142 = vld [vmem:[#allocation8 + $0x10] sm:$0xf]
    %v143 = vld [vmem:[#allocation8 + $0x14] sm:$0xf]
    %v144 = vld [vmem:[#allocation8 + $0x18] sm:$0xf]
    %v145 = vld [vmem:[#allocation8 + $0x1c] sm:$0xf]
    %v146 = vld [vmem:[#allocation8 + $0x20] sm:$0xf]
    %v147 = vld [vmem:[#allocation8 + $0x24] sm:$0xf]
    %v148 = vld [vmem:[#allocation8 + $0x28] sm:$0xf]
    %v149 = vld [vmem:[#allocation8 + $0x2c] sm:$0xf]
    %v150 = vld [vmem:[#allocation8 + $0x30] sm:$0xf]
    %v151 = vld [vmem:[#allocation8 + $0x34] sm:$0xf]
    %v152 = vld [vmem:[#allocation8 + $0x38] sm:$0xf]
    %v153 = vld [vmem:[#allocation8 + $0x3c] sm:$0xf]
    %v154 = vld [vmem:[#allocation10] sm:$0x1]
    %v156 = vperm.slane %v154, 0
    %v174 = vunpack.c.l.b16 %v138
    %v175 = vunpack.c.l.b16 %v139
    %v176 = vunpack.c.l.b16 %v140
    %v177 = vunpack.c.l.b16 %v141
    %v178 = vunpack.c.l.b16 %v142
    %v179 = vunpack.c.l.b16 %v143
    %v180 = vunpack.c.l.b16 %v144
    %v181 = vunpack.c.l.b16 %v145
    %v182 = vunpack.c.l.b16 %v146
    %v183 = vunpack.c.l.b16 %v147
    %v184 = vunpack.c.l.b16 %v148
    %v185 = vunpack.c.l.b16 %v149
    %v186 = vunpack.c.l.b16 %v150
    %v187 = vunpack.c.l.b16 %v151
    %v188 = vunpack.c.l.b16 %v152
    %v189 = vunpack.c.l.b16 %v153
    %v190 = vpack.c.b16 %v175, %v174
    %v191 = vpack.c.b16 %v177, %v176
    %v192 = vpack.c.b16 %v179, %v178
    %v193 = vpack.c.b16 %v181, %v180
    %v194 = vpack.c.b16 %v183, %v182
    %v195 = vpack.c.b16 %v185, %v184
    %v196 = vpack.c.b16 %v187, %v186
    %v197 = vpack.c.b16 %v189, %v188
    %206 = vmatpush.bf16.msra.mxu0 %v197
    %207 = vmatpush.bf16.msra.mxu0 %v196
    %208 = vmatpush.bf16.msra.mxu0 %v195
    %209 = vmatpush.bf16.msra.mxu0 %v194
    %210 = vmatpush.bf16.msra.mxu0 %v193
    %211 = vmatpush.bf16.msra.mxu0 %v192
    %212 = vmatpush.bf16.msra.mxu0 %v191
    %213 = vmatpush.bf16.msra.mxu0 %v190
    %214 = vmatmul.bf16.gmra.mxu0 %v137
    %v215 = vpop.f32.mrf.mxu0
    %v216 = vadd.f32 %v156, %v215
    %v217 = vpop.f32.mrf.mxu0
    %218 = vdwg.mxu0
    %v219 = vmax.f32 %v216, 0.0
    %v220 = vpack.c.bf16 %v219, %v219
    %v221 = vld [vmem:[%s5] sm:$0xf]
    %222 = vmatpush.bf16.xpose.msra.mxu0 0
    %223 = vmatpush.bf16.xpose.msra.mxu0 0
    %224 = vmatpush.bf16.xpose.msra.mxu0 0
    %225 = vmatpush.bf16.xpose.msra.mxu0 0
    %226 = vmatpush.bf16.xpose.msra.mxu0 0
    %227 = vmatpush.bf16.xpose.msra.mxu0 0
    %228 = vmatpush.bf16.xpose.msra.mxu0 0
    %229 = vmatpush.bf16.xpose.msra.mxu0 %v220
    %230 = vmatmul.bf16.gmra.mxu0 %v221
    %v231 = vpop.f32.mrf.mxu0
    %v232 = vadd.f32 0.0, %v231
    %v233 = vpop.f32.mrf.mxu0
    %234 = vdwg.mxu0
    %vm235 = vcmask 64512
    %236 = vst.msk [vmem:[#allocation11] sm:$0xff] %vm235, %v232
    // Predicated region
    $region46: #{tpu_custom_call.1} parent=1 // pred_check
      _
    $region47: #{tpu_custom_call.1} parent=1 // pred_check_branch
      %238 = sbr.rel (0) target = $region49
    $region48: #{tpu_custom_call.1} parent=1 // pred_region
      %240 = vsyncadd [#allocation4], 0
      %s242 = sshll.u32 [#allocation11], 4
      %s243 = int_to_ptr.vmem [resolvable:$true] %s242
      %s244 = sshll.u32 %s6, 4
      %s245 = int_to_ptr.hbm [resolvable:$true] %s244
      %247 = dma.vmem_to_hbm [thread:$0]  %s243, 128, %s245, [#allocation4]
    $region49: #{tpu_custom_call.1} parent=1 // pred_fallthru
      _
    // Predicated region
    $region50: #{tpu_custom_call.1} parent=1 // pred_check
      _
    $region51: #{tpu_custom_call.1} parent=1 // pred_check_branch
      %249 = sbr.rel (0) target = $region53
    $region52: #{tpu_custom_call.1} parent=1 // pred_region
      %251 = dma.done [#allocation4], 128
    $region53: #{tpu_custom_call.1} parent=1 // pred_fallthru
      _
    %252 = vsyncpa [#allocation3], 1
    %253 = vsyncpa [#allocation6], 1
    %254 = vsyncpa [#allocation9], 1
    %255 = vsyncpa [#allocation4], 1

</llo_original>
